<compile_context>
chip_gen: v7x
topology: tpu7x:2x2x1
jax: 0.10.0
libtpu: 0.0.40
codegen_flags: <defaults>
</compile_context>

<pallas_src>
import jax
import jax.numpy as jnp
from jax import lax
from jax.experimental import pallas as pl
from jax.experimental.pallas import tpu as pltpu


_VMEM_LIMIT = 48 * 1024 * 1024   # fits v7x's 64 MiB physical VMEM with headroom


def _round_up(n, m):
    return ((n + m - 1) // m) * m


def _vmem():
    return pl.BlockSpec(memory_space=pltpu.MemorySpace.VMEM)


def _smem():
    return pl.BlockSpec(memory_space=pltpu.MemorySpace.SMEM)


# ----------------------------------------------------------------------------
# Pallas kernels
# ----------------------------------------------------------------------------

def _gru_encoder_kernel(maxlen_ref, x_ref, lens_ref, w_ih_ref, w_hh_ref,
                        b_ih_ref, b_hh_ref, h_out_ref,
                        gi_r_ref, gi_z_ref, gi_n_ref):
    """Unidirectional single-layer GRU; returns last *valid* hidden per sequence.

    maxlen_ref: (1,)  int32 SMEM  -- loop bound = max(lens)
    x_ref:      (T*B, E) bf16     -- time-major flattened embedded inputs
    lens_ref:   (B, 1)   int32    -- valid lengths (pack_padded_sequence semantics)
    w_ih_ref:   (3, E, H) bf16, w_hh_ref: (3, H, H) bf16   gate order: r, z, n
    b_ih_ref / b_hh_ref: (3, H) f32
    h_out_ref:  (B, H) f32
    scratch gi_*: (T*B, H) f32    -- hoisted input projections per gate
    """
    B, H = h_out_ref.shape

    # Hoisted input projection: one large MXU matmul per gate (r, z, n).
    xf = x_ref[...]
    for g, gi_ref in ((0, gi_r_ref), (1, gi_z_ref), (2, gi_n_ref)):
        gi_ref[...] = (jnp.dot(xf, w_ih_ref[g], preferred_element_type=jnp.float32)
                       + b_ih_ref[g:g + 1, :])

    b_hr = b_hh_ref[0:1, :]
    b_hz = b_hh_ref[1:2, :]
    b_hn = b_hh_ref[2:3, :]
    lens = lens_ref[...]                                      # (B, 1) int32

    def step(t, h):
        row = pl.multiple_of(t * B, B)
        hb = h.astype(jnp.bfloat16)
        h_r = jnp.dot(hb, w_hh_ref[0], preferred_element_type=jnp.float32) + b_hr
        h_z = jnp.dot(hb, w_hh_ref[1], preferred_element_type=jnp.float32) + b_hz
        h_n = jnp.dot(hb, w_hh_ref[2], preferred_element_type=jnp.float32) + b_hn
        r = jax.nn.sigmoid(gi_r_ref[pl.ds(row, B), :] + h_r)
        z = jax.nn.sigmoid(gi_z_ref[pl.ds(row, B), :] + h_z)
        n = jnp.tanh(gi_n_ref[pl.ds(row, B), :] + r * h_n)
        h_new = (1.0 - z) * n + z * h
        # pack_padded_sequence: sequences shorter than t keep their last hidden.
        return jnp.where(t < lens, h_new, h)

    h0 = jnp.zeros((B, H), dtype=jnp.float32)
    # Recurrence bounded by the real max length (skips fully-masked tail steps).
    h_out_ref[...] = lax.fori_loop(0, maxlen_ref[0], step, h0)


def _cond_gru_kernel(x_ref, h0_ref, ctx_ref, w_in_ref, w_hid_ref, w_peep_ref,
                     b_in_ref, b_hid_ref, b_peep_ref,
                     out_ref, hT_ref, gi_r_ref, gi_i_ref, gi_n_ref):
    """gensen ConditionalGRU decoder: GRU with a peephole on a fixed context.

    x_ref: (T*B, E) bf16 time-major flattened; h0_ref/ctx_ref: (B, H) f32
    w_in (3,E,H) / w_hid (3,H,H) / w_peep (3,H,H) bf16, biases (3,H) f32
    gate order: r, i(update), n
    out_ref: (T*B, H) f32 all hidden states (time-major), hT_ref: (B, H) final hidden
    """
    B, H = h0_ref.shape
    T = x_ref.shape[0] // B

    # Hoisted input projection (one big MXU matmul per gate).
    xf = x_ref[...]
    for g, gi_ref in ((0, gi_r_ref), (1, gi_i_ref), (2, gi_n_ref)):
        gi_ref[...] = (jnp.dot(xf, w_in_ref[g], preferred_element_type=jnp.float32)
                       + b_in_ref[g:g + 1, :])

    # Peephole depends only on the (time-invariant) context -> hoisted too.
    ctx_b = ctx_ref[...].astype(jnp.bfloat16)
    p_r = jnp.dot(ctx_b, w_peep_ref[0], preferred_element_type=jnp.float32) + b_peep_ref[0:1, :]
    p_i = jnp.dot(ctx_b, w_peep_ref[1], preferred_element_type=jnp.float32) + b_peep_ref[1:2, :]
    p_n = jnp.dot(ctx_b, w_peep_ref[2], preferred_element_type=jnp.float32) + b_peep_ref[2:3, :]

    b_hr = b_hid_ref[0:1, :]
    b_hi = b_hid_ref[1:2, :]
    b_hn = b_hid_ref[2:3, :]

    def step(t, h):
        row = pl.multiple_of(t * B, B)
        hb = h.astype(jnp.bfloat16)
        h_r = jnp.dot(hb, w_hid_ref[0], preferred_element_type=jnp.float32) + b_hr
        h_i = jnp.dot(hb, w_hid_ref[1], preferred_element_type=jnp.float32) + b_hi
        h_n = jnp.dot(hb, w_hid_ref[2], preferred_element_type=jnp.float32) + b_hn
        resetgate = jax.nn.sigmoid(gi_r_ref[pl.ds(row, B), :] + h_r + p_r)
        inputgate = jax.nn.sigmoid(gi_i_ref[pl.ds(row, B), :] + h_i + p_i)
        newgate = jnp.tanh(gi_n_ref[pl.ds(row, B), :] + resetgate * h_n + p_n)
        hy = newgate + inputgate * (h - newgate)
        out_ref[pl.ds(row, B), :] = hy
        return hy

    hT_ref[...] = lax.fori_loop(0, T, step, h0_ref[...])


def _linear_kernel(x_ref, w_ref, b_ref, o_ref):
    """decoder2vocab tile: (tm, H) @ (H, tn) + b  (bf16 operands, f32 accumulate)."""
    o_ref[...] = (jnp.dot(x_ref[...].astype(jnp.bfloat16), w_ref[...],
                          preferred_element_type=jnp.float32) + b_ref[...])


def _nli_head_kernel(s1_ref, s2_ref, w1_ref, b1_ref, w2_ref, b2_ref, o_ref):
    """NLI classifier: Linear(4H,512) + ReLU + Linear(512, 3 padded to 128).

    features = concat([u, v, |u-v|, u*v]); implemented as 4 partial matmuls
    against row-slabs of W1 (avoids an in-kernel concatenate).
    """
    s1 = s1_ref[...]
    s2 = s2_ref[...]
    H = s1.shape[1]

    def slab(a, g):
        return jnp.dot(a.astype(jnp.bfloat16), w1_ref[g * H:(g + 1) * H, :],
                       preferred_element_type=jnp.float32)

    h = (slab(s1, 0) + slab(s2, 1) + slab(jnp.abs(s1 - s2), 2)
         + slab(s1 * s2, 3) + b1_ref[...])
    h = jnp.maximum(h, 0.0)
    o_ref[...] = (jnp.dot(h.astype(jnp.bfloat16), w2_ref[...],
                          preferred_element_type=jnp.float32) + b2_ref[...])


# ----------------------------------------------------------------------------
# Pallas wrappers
# ----------------------------------------------------------------------------

def gru_encode(x_tme, lens, enc):
    """x_tme: (T, B, E) bf16 time-major; lens: (B,) int32. Returns (B, H) f32."""
    T, B, E = x_tme.shape
    H = enc["w_hh"].shape[2]
    Bp = _round_up(B, 8)                         # unmasked sublane-dense stores
    lens = lens.astype(jnp.int32).reshape(-1)
    if Bp != B:
        x_tme = jnp.pad(x_tme, ((0, 0), (0, Bp - B), (0, 0)))
        lens = jnp.pad(lens, (0, Bp - B))
    x_flat = x_tme.reshape(T * Bp, E)
    maxlen = jnp.max(lens).reshape(1).astype(jnp.int32)
    # TODO(synk): for very long T, stream x over a T grid ("arbitrary") with the
    # hidden carried in scratch instead of holding the whole (T*B, E) in VMEM.
    h = pl.pallas_call(
        _gru_encoder_kernel,
        out_shape=jax.ShapeDtypeStruct((Bp, H), jnp.float32),
        in_specs=[_smem()] + [_vmem()] * 6,
        out_specs=_vmem(),
        scratch_shapes=[pltpu.VMEM((T * Bp, H), jnp.float32)] * 3,
        compiler_params=pltpu.CompilerParams(vmem_limit_bytes=_VMEM_LIMIT),
    )(maxlen, x_flat, lens.reshape(Bp, 1),
      enc["w_ih"], enc["w_hh"], enc["b_ih"], enc["b_hh"])
    return h[:B]


def conditional_gru(x_tme, h0, ctx, dec):
    """x_tme: (T, B, E) bf16 time-major. Returns ((T, B, H), (B, H)) f32."""
    T, B, E = x_tme.shape
    H = h0.shape[1]
    Bp = _round_up(B, 8)
    if Bp != B:
        x_tme = jnp.pad(x_tme, ((0, 0), (0, Bp - B), (0, 0)))
        h0 = jnp.pad(h0, ((0, Bp - B), (0, 0)))
        ctx = jnp.pad(ctx, ((0, Bp - B), (0, 0)))
    x_flat = x_tme.reshape(T * Bp, E)
    out_flat, hT = pl.pallas_call(
        _cond_gru_kernel,
        out_shape=(jax.ShapeDtypeStruct((T * Bp, H), jnp.float32),
                   jax.ShapeDtypeStruct((Bp, H), jnp.float32)),
        in_specs=[_vmem()] * 9,
        out_specs=(_vmem(), _vmem()),
        scratch_shapes=[pltpu.VMEM((T * Bp, H), jnp.float32)] * 3,
        compiler_params=pltpu.CompilerParams(vmem_limit_bytes=_VMEM_LIMIT),
    )(x_flat, h0, ctx, dec["w_in"], dec["w_hid"], dec["w_peep"],
      dec["b_in"], dec["b_hid"], dec["b_peep"])
    out = out_flat.reshape(T, Bp, H)[:, :B, :]
    return out, hT[:B]


def linear_tiled(x, w, b, tm=256, tn=512):
    """Tiled decoder2vocab: (N, H) @ (H, V) + b with a (rows, vocab) parallel grid."""
    N, K = x.shape
    V = w.shape[1]
    tm = min(tm, _round_up(N, 8))
    tn = min(tn, _round_up(V, 128))
    Np, Vp = _round_up(N, tm), _round_up(V, tn)
    xp = jnp.pad(x, ((0, Np - N), (0, 0))) if Np != N else x
    wp = jnp.pad(w, ((0, 0), (0, Vp - V))) if Vp != V else w
    bp = jnp.pad(b, ((0, 0), (0, Vp - V))) if Vp != V else b
    out = pl.pallas_call(
        _linear_kernel,
        out_shape=jax.ShapeDtypeStruct((Np, Vp), jnp.float32),
        grid=(Np // tm, Vp // tn),
        in_specs=[pl.BlockSpec((tm, K), lambda i, j: (i, 0)),
                  pl.BlockSpec((K, tn), lambda i, j: (0, j)),
                  pl.BlockSpec((1, tn), lambda i, j: (0, j))],
        out_specs=pl.BlockSpec((tm, tn), lambda i, j: (i, j)),
        compiler_params=pltpu.CompilerParams(
            dimension_semantics=("parallel", "parallel"),
            vmem_limit_bytes=_VMEM_LIMIT),
    )(xp, wp, bp)
    return out[:N, :V]


def nli_head(s1_h, s2_h, head):
    B, H = s1_h.shape
    Bp = _round_up(B, 8)
    if Bp != B:
        s1_h = jnp.pad(s1_h, ((0, Bp - B), (0, 0)))
        s2_h = jnp.pad(s2_h, ((0, Bp - B), (0, 0)))
    # Pad the 3-wide output to a full 128-lane slab (unmasked stores).
    w2 = jnp.pad(head["w2"], ((0, 0), (0, 128 - head["w2"].shape[1])))
    b2 = jnp.pad(head["b2"], ((0, 0), (0, 128 - head["b2"].shape[1])))
    out = pl.pallas_call(
        _nli_head_kernel,
        out_shape=jax.ShapeDtypeStruct((Bp, 128), jnp.float32),
        in_specs=[_vmem()] * 6,
        out_specs=_vmem(),
        compiler_params=pltpu.CompilerParams(vmem_limit_bytes=_VMEM_LIMIT),
    )(s1_h, s2_h, head["w1"], head["b1"], w2, b2)
    return out[:B, :3]


# ----------------------------------------------------------------------------
# Parameter init (deterministic, matching the shapes declared in __init__)
# Weights are stored bf16 (MXU operands), biases f32; GRU weights have a leading
# gate axis (3, in_dim, H) so gate slabs never cross vreg lane boundaries.
# ----------------------------------------------------------------------------

def init_params(key, cfg):
    E_s, E_t = cfg["src_emb_dim"], cfg["trg_emb_dim"]
    Vs, Vt = cfg["src_vocab_size"], cfg["trg_vocab_size"]
    Hs, Ht = cfg["src_hidden_dim"], cfg["trg_hidden_dim"]
    ntasks = cfg["num_tasks"]

    def u(k, shape, scale, dtype=jnp.float32):
        return jax.random.uniform(k, shape, jnp.float32, -scale, scale).astype(dtype)

    keys = iter(jax.random.split(key, 16 + 8 * ntasks))
    initrange = 0.1
    gs = 1.0 / (Hs ** 0.5)
    nli_s1 = (1.0 / (4 * Hs)) ** 0.5
    nli_s2 = (1.0 / 512) ** 0.5

    params = {
        # init_weights(): embeddings uniform(-0.1, 0.1)
        "src_emb": u(next(keys), (Vs, E_s), initrange, jnp.bfloat16),
        "encoder": {
            "w_ih": u(next(keys), (3, E_s, Hs), gs, jnp.bfloat16),
            "w_hh": u(next(keys), (3, Hs, Hs), gs, jnp.bfloat16),
            "b_ih": u(next(keys), (3, Hs), gs),
            "b_hh": u(next(keys), (3, Hs), gs),
        },
        "trg_emb": [],
        "decoders": [],
        "decoder2vocab": [],
        "nli_decoder": {
            "w1": u(next(keys), (4 * Hs, 512), nli_s1, jnp.bfloat16),
            "b1": u(next(keys), (1, 512), nli_s1),
            "w2": u(next(keys), (512, 3), nli_s2, jnp.bfloat16),
            "b2": u(next(keys), (1, 3), nli_s2),
        },
    }
    lin_scale = 1.0 / (Ht ** 0.5)
    emb_scale = 1.0 / (E_t ** 0.5)
    for _ in range(ntasks):
        params["trg_emb"].append(u(next(keys), (Vt, E_t), initrange, jnp.bfloat16))
        params["decoders"].append({
            "w_in": u(next(keys), (3, E_t, Ht), emb_scale, jnp.bfloat16),
            "b_in": u(next(keys), (3, Ht), emb_scale),
            "w_hid": u(next(keys), (3, Ht, Ht), lin_scale, jnp.bfloat16),
            "b_hid": u(next(keys), (3, Ht), lin_scale),
            "w_peep": u(next(keys), (3, Ht, Ht), lin_scale, jnp.bfloat16),
            "b_peep": u(next(keys), (3, Ht), lin_scale),
        })
        params["decoder2vocab"].append({
            "w": u(next(keys), (Ht, Vt), lin_scale, jnp.bfloat16),
            "b": jnp.zeros((1, Vt), jnp.float32),   # init_weights(): bias = 0
        })
    return params


# ----------------------------------------------------------------------------
# Forward pass (mirrors MultitaskModel.forward, eval mode)
# ----------------------------------------------------------------------------

def multitask_forward(params, minibatch, task_idx, cfg, return_hidden=False):
    if minibatch["type"] == "nli":
        sent1, sent2 = minibatch["sent1"], minibatch["sent2"]
        B = sent1.shape[0]
        T = max(sent1.shape[1], sent2.shape[1])
        pad_tok = cfg["pad_token_src"]
        s1p = jnp.pad(sent1, ((0, 0), (0, T - sent1.shape[1])), constant_values=pad_tok)
        s2p = jnp.pad(sent2, ((0, 0), (0, T - sent2.shape[1])), constant_values=pad_tok)
        toks = jnp.concatenate([s1p, s2p], axis=0)                        # (2B, T)
        lens = jnp.concatenate([minibatch["sent1_lens"],
                                minibatch["sent2_lens"]], axis=0)         # (2B,)
        # Fused shared encoder over both sentences in one pallas_call; gather with
        # transposed token ids so the embedded tensor is born time-major (no HBM
        # transpose of the big activation).
        emb = jnp.take(params["src_emb"], toks.T, axis=0)                 # (T, 2B, E)
        h = gru_encode(emb, lens, params["encoder"])                      # (2B, H)
        # index_select to undo length-sorting
        s1_h = jnp.take(h[:B], minibatch["rev_sent1"], axis=0)
        s2_h = jnp.take(h[B:], minibatch["rev_sent2"], axis=0)
        # nn.Dropout(0.3) is identity in eval mode
        class_logits = nli_head(s1_h, s2_h, params["nli_decoder"])
        if return_hidden:
            return s1_h, s2_h, class_logits
        return class_logits
    else:
        src, trg = minibatch["input_src"], minibatch["input_trg"]
        B, Tt = trg.shape
        src_emb = jnp.take(params["src_emb"], src.T, axis=0)              # (T_src, B, E)
        trg_emb = jnp.take(params["trg_emb"][task_idx], trg.T, axis=0)    # (T_trg, B, E)
        h_t = gru_encode(src_emb, minibatch["src_lens"], params["encoder"])   # (B, H)
        # enc_drp is identity (dropout == 0.0); h_t.view(-1, trg_hidden_dim) == h_t
        trg_h, _ = conditional_gru(trg_emb, h_t, h_t, params["decoders"][task_idx])
        H = h_t.shape[1]
        flat = jnp.transpose(trg_h, (1, 0, 2)).reshape(B * Tt, H)
        d2v = params["decoder2vocab"][task_idx]
        decoder_logit = linear_tiled(flat, d2v["w"], d2v["b"]).reshape(B, Tt, -1)
        # TODO(synk): paired_tasks second-decoder path omitted (paired_tasks=None here).
        if return_hidden:
            return decoder_logit, h_t[None]
        return decoder_logit


# ----------------------------------------------------------------------------
# Demo
# ----------------------------------------------------------------------------

if __name__ == "__main__":
    cfg = dict(src_emb_dim=32, trg_emb_dim=32,
               src_vocab_size=50, trg_vocab_size=40,
               src_hidden_dim=32, trg_hidden_dim=32,
               pad_token_src=0, pad_token_trg=0,
               num_tasks=2, bidirectional=False)
    # TODO(synk): bidirectional=True encoder variant not implemented.

    key = jax.random.PRNGKey(0)
    k_param, k_src, k_trg, k_s1, k_s2 = jax.random.split(key, 5)
    params = init_params(k_param, cfg)

    B, T_src, T_trg = 2, 8, 7

    # --- seq2seq minibatch (lengths sorted descending, pack_padded convention) ---
    seq2seq_mb = {
        "type": "seq2seq",
        "input_src": jax.random.randint(k_src, (B, T_src), 1,
                                        cfg["src_vocab_size"], jnp.int32),
        "input_trg": jax.random.randint(k_trg, (B, T_trg), 1,
                                        cfg["trg_vocab_size"], jnp.int32),
        "src_lens": jnp.array([8, 6], jnp.int32),
    }
    decoder_logit = multitask_forward(params, seq2seq_mb, task_idx=0, cfg=cfg)
    decoder_logit = jax.block_until_ready(decoder_logit)
    assert decoder_logit.shape == (B, T_trg, cfg["trg_vocab_size"])
    assert bool(jnp.all(jnp.isfinite(decoder_logit)))

    # --- NLI minibatch ---
    nli_mb = {
        "type": "nli",
        "sent1": jax.random.randint(k_s1, (B, T_src), 1,
                                    cfg["src_vocab_size"], jnp.int32),
        "sent2": jax.random.randint(k_s2, (B, T_trg), 1,
                                    cfg["src_vocab_size"], jnp.int32),
        "sent1_lens": jnp.array([8, 5], jnp.int32),
        "sent2_lens": jnp.array([7, 4], jnp.int32),
        "rev_sent1": jnp.array([1, 0], jnp.int32),
        "rev_sent2": jnp.array([1, 0], jnp.int32),
    }
    class_logits = multitask_forward(params, nli_mb, task_idx=0, cfg=cfg)
    class_logits = jax.block_until_ready(class_logits)
    assert class_logits.shape == (B, 3)
    assert bool(jnp.all(jnp.isfinite(class_logits)))

    print("KERNEL_OK")
</pallas_src>

<mosaic_0001>
module attributes {stable_mosaic.version = 11 : i64} {
  func.func @_gru_encoder_kernel(%arg0: memref<1xi32, #tpu.memory_space<smem>>, %arg1: memref<64x32xbf16, #tpu.memory_space<vmem>>, %arg2: memref<8x1xi32, #tpu.memory_space<vmem>>, %arg3: memref<3x32x32xbf16, #tpu.memory_space<vmem>>, %arg4: memref<3x32x32xbf16, #tpu.memory_space<vmem>>, %arg5: memref<3x32xf32, #tpu.memory_space<vmem>>, %arg6: memref<3x32xf32, #tpu.memory_space<vmem>>, %arg7: memref<8x32xf32, #tpu.memory_space<vmem>>, %arg8: memref<64x32xf32, #tpu.memory_space<vmem>>, %arg9: memref<64x32xf32, #tpu.memory_space<vmem>>, %arg10: memref<64x32xf32, #tpu.memory_space<vmem>>) attributes {dimension_semantics = [], scalar_prefetch = 0 : i64, scratch_operands = 3 : i64, tpu.core_type = #tpu.core_type<tc>} {
    %c0 = arith.constant 0 : index
    %c0_0 = arith.constant 0 : index
    %0 = vector.load %arg1[%c0, %c0_0] : memref<64x32xbf16, #tpu.memory_space<vmem>>, vector<64x32xbf16>
    %c0_1 = arith.constant 0 : index
    %c0_2 = arith.constant 0 : index
    %c0_3 = arith.constant 0 : index
    %1 = vector.load %arg3[%c0_1, %c0_2, %c0_3] : memref<3x32x32xbf16, #tpu.memory_space<vmem>>, vector<1x32x32xbf16>
    %2 = vector.shape_cast %1 : vector<1x32x32xbf16> to vector<32x32xbf16>
    %cst = arith.constant dense<0.000000e+00> : vector<64x32xf32>
    %3 = tpu.matmul %0, %2, %cst {dimension_numbers = #tpu.dot_dimension_numbers<[1], [0], [0], [1], [0, 0, 1, 1], [], []>} : vector<64x32xbf16>, vector<32x32xbf16>, vector<64x32xf32> -> vector<64x32xf32>
    %c0_4 = arith.constant 0 : index
    %c0_5 = arith.constant 0 : index
    %4 = vector.load %arg5[%c0_4, %c0_5] : memref<3x32xf32, #tpu.memory_space<vmem>>, vector<1x32xf32>
    %5 = vector.broadcast %4 : vector<1x32xf32> to vector<64x32xf32>
    %6 = arith.addf %3, %5 : vector<64x32xf32>
    %c0_6 = arith.constant 0 : index
    %c0_7 = arith.constant 0 : index
    %7 = vector.load %arg8[%c0_6, %c0_7] : memref<64x32xf32, #tpu.memory_space<vmem>>, vector<64x32xf32>
    tpu.vector_store %arg8[%c0_6, %c0_7], %6 {strides = array<i32>} : memref<64x32xf32, #tpu.memory_space<vmem>>, vector<64x32xf32>,
    %c1 = arith.constant 1 : index
    %c0_8 = arith.constant 0 : index
    %c0_9 = arith.constant 0 : index
    %8 = vector.load %arg3[%c1, %c0_8, %c0_9] : memref<3x32x32xbf16, #tpu.memory_space<vmem>>, vector<1x32x32xbf16>
    %9 = vector.shape_cast %8 : vector<1x32x32xbf16> to vector<32x32xbf16>
    %cst_10 = arith.constant dense<0.000000e+00> : vector<64x32xf32>
    %10 = tpu.matmul %0, %9, %cst_10 {dimension_numbers = #tpu.dot_dimension_numbers<[1], [0], [0], [1], [0, 0, 1, 1], [], []>} : vector<64x32xbf16>, vector<32x32xbf16>, vector<64x32xf32> -> vector<64x32xf32>
    %c1_11 = arith.constant 1 : index
    %c0_12 = arith.constant 0 : index
    %11 = vector.load %arg5[%c1_11, %c0_12] : memref<3x32xf32, #tpu.memory_space<vmem>>, vector<1x32xf32>
    %12 = vector.broadcast %11 : vector<1x32xf32> to vector<64x32xf32>
    %13 = arith.addf %10, %12 : vector<64x32xf32>
    %c0_13 = arith.constant 0 : index
    %c0_14 = arith.constant 0 : index
    %14 = vector.load %arg9[%c0_13, %c0_14] : memref<64x32xf32, #tpu.memory_space<vmem>>, vector<64x32xf32>
    tpu.vector_store %arg9[%c0_13, %c0_14], %13 {strides = array<i32>} : memref<64x32xf32, #tpu.memory_space<vmem>>, vector<64x32xf32>,
    %c2 = arith.constant 2 : index
    %c0_15 = arith.constant 0 : index
    %c0_16 = arith.constant 0 : index
    %15 = vector.load %arg3[%c2, %c0_15, %c0_16] : memref<3x32x32xbf16, #tpu.memory_space<vmem>>, vector<1x32x32xbf16>
    %16 = vector.shape_cast %15 : vector<1x32x32xbf16> to vector<32x32xbf16>
    %cst_17 = arith.constant dense<0.000000e+00> : vector<64x32xf32>
    %17 = tpu.matmul %0, %16, %cst_17 {dimension_numbers = #tpu.dot_dimension_numbers<[1], [0], [0], [1], [0, 0, 1, 1], [], []>} : vector<64x32xbf16>, vector<32x32xbf16>, vector<64x32xf32> -> vector<64x32xf32>
    %c2_18 = arith.constant 2 : index
    %c0_19 = arith.constant 0 : index
    %18 = vector.load %arg5[%c2_18, %c0_19] : memref<3x32xf32, #tpu.memory_space<vmem>>, vector<1x32xf32>
    %19 = vector.broadcast %18 : vector<1x32xf32> to vector<64x32xf32>
    %20 = arith.addf %17, %19 : vector<64x32xf32>
    %c0_20 = arith.constant 0 : index
    %c0_21 = arith.constant 0 : index
    %21 = vector.load %arg10[%c0_20, %c0_21] : memref<64x32xf32, #tpu.memory_space<vmem>>, vector<64x32xf32>
    tpu.vector_store %arg10[%c0_20, %c0_21], %20 {strides = array<i32>} : memref<64x32xf32, #tpu.memory_space<vmem>>, vector<64x32xf32>,
    %c0_22 = arith.constant 0 : index
    %c0_23 = arith.constant 0 : index
    %22 = vector.load %arg6[%c0_22, %c0_23] : memref<3x32xf32, #tpu.memory_space<vmem>>, vector<1x32xf32>
    %c1_24 = arith.constant 1 : index
    %c0_25 = arith.constant 0 : index
    %23 = vector.load %arg6[%c1_24, %c0_25] : memref<3x32xf32, #tpu.memory_space<vmem>>, vector<1x32xf32>
    %c2_26 = arith.constant 2 : index
    %c0_27 = arith.constant 0 : index
    %24 = vector.load %arg6[%c2_26, %c0_27] : memref<3x32xf32, #tpu.memory_space<vmem>>, vector<1x32xf32>
    %c0_28 = arith.constant 0 : index
    %c0_29 = arith.constant 0 : index
    %25 = vector.load %arg2[%c0_28, %c0_29] : memref<8x1xi32, #tpu.memory_space<vmem>>, vector<8x1xi32>
    %cst_30 = arith.constant 0.000000e+00 : f32
    %26 = vector.broadcast %cst_30 : f32 to vector<8x32xf32>
    %c0_31 = arith.constant 0 : index
    %27 = memref.load %arg0[%c0_31] : memref<1xi32, #tpu.memory_space<smem>>
    %c0_i32 = arith.constant 0 : i32
    %28 = arith.subi %27, %c0_i32 : i32
    %29 = arith.addi %c0_i32, %28 : i32
    %c1_i32 = arith.constant 1 : i32
    %30 = scf.for %arg11 = %c0_i32 to %29 step %c1_i32 iter_args(%arg12 = %26) -> (vector<8x32xf32>)  : i32 {
      %c8_i32 = arith.constant 8 : i32
      %32 = arith.muli %arg11, %c8_i32 : i32
      %33 = tpu.assume_multiple %32, 8 : i32
      %34 = arith.truncf %arg12 : vector<8x32xf32> to vector<8x32xbf16>
      %c0_34 = arith.constant 0 : index
      %c0_35 = arith.constant 0 : index
      %c0_36 = arith.constant 0 : index
      %35 = vector.load %arg4[%c0_34, %c0_35, %c0_36] : memref<3x32x32xbf16, #tpu.memory_space<vmem>>, vector<1x32x32xbf16>
      %36 = vector.shape_cast %35 : vector<1x32x32xbf16> to vector<32x32xbf16>
      %cst_37 = arith.constant dense<0.000000e+00> : vector<8x32xf32>
      %37 = tpu.matmul %34, %36, %cst_37 {dimension_numbers = #tpu.dot_dimension_numbers<[1], [0], [0], [1], [0, 0, 1, 1], [], []>} : vector<8x32xbf16>, vector<32x32xbf16>, vector<8x32xf32> -> vector<8x32xf32>
      %38 = vector.broadcast %22 : vector<1x32xf32> to vector<8x32xf32>
      %39 = arith.addf %37, %38 : vector<8x32xf32>
      %c1_38 = arith.constant 1 : index
      %c0_39 = arith.constant 0 : index
      %c0_40 = arith.constant 0 : index
      %40 = vector.load %arg4[%c1_38, %c0_39, %c0_40] : memref<3x32x32xbf16, #tpu.memory_space<vmem>>, vector<1x32x32xbf16>
      %41 = vector.shape_cast %40 : vector<1x32x32xbf16> to vector<32x32xbf16>
      %cst_41 = arith.constant dense<0.000000e+00> : vector<8x32xf32>
      %42 = tpu.matmul %34, %41, %cst_41 {dimension_numbers = #tpu.dot_dimension_numbers<[1], [0], [0], [1], [0, 0, 1, 1], [], []>} : vector<8x32xbf16>, vector<32x32xbf16>, vector<8x32xf32> -> vector<8x32xf32>
      %43 = vector.broadcast %23 : vector<1x32xf32> to vector<8x32xf32>
      %44 = arith.addf %42, %43 : vector<8x32xf32>
      %c2_42 = arith.constant 2 : index
      %c0_43 = arith.constant 0 : index
      %c0_44 = arith.constant 0 : index
      %45 = vector.load %arg4[%c2_42, %c0_43, %c0_44] : memref<3x32x32xbf16, #tpu.memory_space<vmem>>, vector<1x32x32xbf16>
      %46 = vector.shape_cast %45 : vector<1x32x32xbf16> to vector<32x32xbf16>
      %cst_45 = arith.constant dense<0.000000e+00> : vector<8x32xf32>
      %47 = tpu.matmul %34, %46, %cst_45 {dimension_numbers = #tpu.dot_dimension_numbers<[1], [0], [0], [1], [0, 0, 1, 1], [], []>} : vector<8x32xbf16>, vector<32x32xbf16>, vector<8x32xf32> -> vector<8x32xf32>
      %48 = vector.broadcast %24 : vector<1x32xf32> to vector<8x32xf32>
      %49 = arith.addf %47, %48 : vector<8x32xf32>
      %50 = arith.index_cast %33 : i32 to index
      %c0_46 = arith.constant 0 : index
      %51 = vector.load %arg8[%50, %c0_46] : memref<64x32xf32, #tpu.memory_space<vmem>>, vector<8x32xf32>
      %52 = arith.addf %51, %39 : vector<8x32xf32>
      %53 = arith.negf %52 : vector<8x32xf32>
      %54 = math.exp %53 : vector<8x32xf32>
      %cst_47 = arith.constant 1.000000e+00 : f32
      %55 = vector.broadcast %cst_47 : f32 to vector<8x32xf32>
      %56 = arith.addf %55, %54 : vector<8x32xf32>
      %57 = arith.divf %55, %56 : vector<8x32xf32>
      %58 = arith.index_cast %33 : i32 to index
      %c0_48 = arith.constant 0 : index
      %59 = vector.load %arg9[%58, %c0_48] : memref<64x32xf32, #tpu.memory_space<vmem>>, vector<8x32xf32>
      %60 = arith.addf %59, %44 : vector<8x32xf32>
      %61 = arith.negf %60 : vector<8x32xf32>
      %62 = math.exp %61 : vector<8x32xf32>
      %cst_49 = arith.constant 1.000000e+00 : f32
      %63 = vector.broadcast %cst_49 : f32 to vector<8x32xf32>
      %64 = arith.addf %63, %62 : vector<8x32xf32>
      %65 = arith.divf %63, %64 : vector<8x32xf32>
      %66 = arith.index_cast %33 : i32 to index
      %c0_50 = arith.constant 0 : index
      %67 = vector.load %arg10[%66, %c0_50] : memref<64x32xf32, #tpu.memory_space<vmem>>, vector<8x32xf32>
      %68 = arith.mulf %57, %49 : vector<8x32xf32>
      %69 = arith.addf %67, %68 : vector<8x32xf32>
      %70 = math.tanh %69 : vector<8x32xf32>
      %cst_51 = arith.constant 1.000000e+00 : f32
      %71 = vector.broadcast %cst_51 : f32 to vector<8x32xf32>
      %72 = arith.subf %71, %65 : vector<8x32xf32>
      %73 = arith.mulf %72, %70 : vector<8x32xf32>
      %74 = arith.mulf %65, %arg12 : vector<8x32xf32>
      %75 = arith.addf %73, %74 : vector<8x32xf32>
      %76 = vector.broadcast %arg11 : i32 to vector<8x1xi32>
      %77 = arith.cmpi slt, %76, %25 : vector<8x1xi32>
      %78 = vector.shape_cast %77 : vector<8x1xi1> to vector<8x1xi1>
      %79 = vector.broadcast %78 : vector<8x1xi1> to vector<8x32xi1>
      %80 = arith.select %79, %75, %arg12 : vector<8x32xi1>, vector<8x32xf32>
      scf.yield %80 : vector<8x32xf32>
    }
    %c0_32 = arith.constant 0 : index
    %c0_33 = arith.constant 0 : index
    %31 = vector.load %arg7[%c0_32, %c0_33] : memref<8x32xf32, #tpu.memory_space<vmem>>, vector<8x32xf32>
    tpu.vector_store %arg7[%c0_32, %c0_33], %30 {strides = array<i32>} : memref<8x32xf32, #tpu.memory_space<vmem>>, vector<8x32xf32>,
    return
  }
}

</mosaic_0001>

<llo_original>
// kernel: tpu_custom_call.1
$region0: #{tpu_custom_call.1}
  #allocation0 [shape = 'u32[]', space=smem, size = 0x4, offset = 0x4, fixed_abs, tag = 'smem constant byte address 0x4 - core index']
  #allocation1 [shape = 'u32[144,128]{1,0:T(1,128)}', space=vmem, size = 0x12000, scoped, tag = 'internal scratch']
  #allocation2 [shape = 'f32[64,32]{1,0:T(8,128)}', space=vmem, size = 0x8000, scoped, tag = 'scratch operand']
  #allocation3 [shape = 'f32[64,32]{1,0:T(8,128)}', space=vmem, size = 0x8000, scoped, tag = 'scratch operand']
  #allocation4 [shape = 'f32[64,32]{1,0:T(8,128)}', space=vmem, size = 0x8000, scoped, tag = 'scratch operand']
  #allocation5 [shape = 's32[1]{0:T(128)S(6)}', space=smem, size = 0x200, scoped, tag = 'scoped memory for tpu_custom_call.1']
  %s0 = inlined_call_operand.<no memory space> [shape: s32[1], index: 0, kind: input, shape index: {}]
  %s1 = inlined_call_operand.vmem [shape: bf16[64,32], index: 1, kind: input, shape index: {}]
  %s2 = inlined_call_operand.vmem [shape: s32[8,1], index: 2, kind: input, shape index: {}]
  %s3 = inlined_call_operand.vmem [shape: bf16[3,32,32], index: 3, kind: input, shape index: {}]
  %s4 = inlined_call_operand.hbm [shape: bf16[3,32,32], index: 4, kind: input, shape index: {}]
  %s5 = inlined_call_operand.vmem [shape: f32[3,32], index: 5, kind: input, shape index: {}]
  %s6 = inlined_call_operand.vmem [shape: f32[3,32], index: 6, kind: input, shape index: {}]
  %s7 = inlined_call_operand.hbm [shape: f32[8,32], index: 7, kind: output, shape index: {}]
  %s8 = sld [smem:[#allocation0]]
  $region49: #{tpu_custom_call.1} parent=0
    _
  %s10 = ssub.s32 1, %s8
  %s11 = scalar_select 0, %s10, %s8
  %12 = sst [smem:[#allocation5]] %s0
  $region1: #{tpu_custom_call.1} parent=0
    #allocation6 [shape = 'u8[24576]{0}', space=vmem, size = 0x6000, scoped, tag = 'input window, operand 4, single buffered']
    #allocation7 [shape = 's32[1]{0}', space=sflag, size = 0x4, scoped, tag = 'scoped memory for tpu_custom_call.1']
    #allocation8 [shape = 's32[1]{0}', space=sflag, size = 0x4, scoped, tag = 'scoped memory for tpu_custom_call.1']
    #allocation9 [shape = 'u8[4096]{0}', space=vmem, size = 0x1000, scoped, tag = 'output window, operand 0, single buffered']
    %13 = vsyncpa [#allocation7], 0
    %14 = vsyncpa [#allocation8], 0
    // Predicated region
    $region2: #{tpu_custom_call.1} parent=1 // pred_check
      _
    $region3: #{tpu_custom_call.1} parent=1 // pred_check_branch
      %16 = sbr.rel (0) target = $region5
    $region4: #{tpu_custom_call.1} parent=1 // pred_region
      _
    $region5: #{tpu_custom_call.1} parent=1 // pred_fallthru
      _
    // Predicated region
    $region6: #{tpu_custom_call.1} parent=1 // pred_check
      _
    $region7: #{tpu_custom_call.1} parent=1 // pred_check_branch
      %18 = sbr.rel (0) target = $region9
    $region8: #{tpu_custom_call.1} parent=1 // pred_region
      _
    $region9: #{tpu_custom_call.1} parent=1 // pred_fallthru
      _
    // Predicated region
    $region10: #{tpu_custom_call.1} parent=1 // pred_check
      _
    $region11: #{tpu_custom_call.1} parent=1 // pred_check_branch
      %20 = sbr.rel (0) target = $region13
    $region12: #{tpu_custom_call.1} parent=1 // pred_region
      _
    $region13: #{tpu_custom_call.1} parent=1 // pred_fallthru
      _
    // Predicated region
    $region14: #{tpu_custom_call.1} parent=1 // pred_check
      _
    $region15: #{tpu_custom_call.1} parent=1 // pred_check_branch
      %22 = sbr.rel (0) target = $region17
    $region16: #{tpu_custom_call.1} parent=1 // pred_region
      _
    $region17: #{tpu_custom_call.1} parent=1 // pred_fallthru
      _
    // Predicated region
    $region18: #{tpu_custom_call.1} parent=1 // pred_check
      _
    $region19: #{tpu_custom_call.1} parent=1 // pred_check_branch
      %24 = sbr.rel (0) target = $region21
    $region20: #{tpu_custom_call.1} parent=1 // pred_region
      %s26 = ssub.s32 768, 768
      %27 = vsyncadd [#allocation7], %s26
      %s28 = sshll.u32 [#allocation6], 4
      %s29 = int_to_ptr.vmem [resolvable:$true] %s28
      %34 = dma.hbm_to_vmem [thread:$0]  %s4, 768, %s29, [#allocation7], 64, 64, 4
    $region21: #{tpu_custom_call.1} parent=1 // pred_fallthru
      _
    // Predicated region
    $region22: #{tpu_custom_call.1} parent=1 // pred_check
      _
    $region23: #{tpu_custom_call.1} parent=1 // pred_check_branch
      %36 = sbr.rel (0) target = $region25
    $region24: #{tpu_custom_call.1} parent=1 // pred_region
      _
    $region25: #{tpu_custom_call.1} parent=1 // pred_fallthru
      _
    // Predicated region
    $region26: #{tpu_custom_call.1} parent=1 // pred_check
      _
    $region27: #{tpu_custom_call.1} parent=1 // pred_check_branch
      %38 = sbr.rel (0) target = $region29
    $region28: #{tpu_custom_call.1} parent=1 // pred_region
      _
    $region29: #{tpu_custom_call.1} parent=1 // pred_fallthru
      _
    // Predicated region
    $region30: #{tpu_custom_call.1} parent=1 // pred_check
      _
    $region31: #{tpu_custom_call.1} parent=1 // pred_check_branch
      %40 = sbr.rel (0) target = $region33
    $region32: #{tpu_custom_call.1} parent=1 // pred_region
      %41 = dma.done [#allocation7], 768
    $region33: #{tpu_custom_call.1} parent=1 // pred_fallthru
      _
    %v43 = vld [vmem:[%s1] sm:$0xf]
    %v44 = vld [vmem:[%s1 + $0x4] sm:$0xf]
    %v45 = vld [vmem:[%s1 + $0x8] sm:$0xf]
    %v46 = vld [vmem:[%s1 + $0xc] sm:$0xf]
    %v47 = vld [vmem:[%s1 + $0x10] sm:$0xf]
    %v48 = vld [vmem:[%s1 + $0x14] sm:$0xf]
    %v49 = vld [vmem:[%s1 + $0x18] sm:$0xf]
    %v50 = vld [vmem:[%s1 + $0x1c] sm:$0xf]
    %v51 = vld [vmem:[%s3] sm:$0xf]
    %v52 = vld [vmem:[%s3 + $0x4] sm:$0xf]
    %v53 = vld [vmem:[%s3 + $0x8] sm:$0xf]
    %v54 = vld [vmem:[%s3 + $0xc] sm:$0xf]
    %v55 = vld [vmem:[%s5] sm:$0x1]
    %v56 = vlaneseq
    %v57 = vshrl.u32 %v56, 7
    %v58 = vsub.s32 0, %v57
    %v59 = vrot.slane %v55, %v58
    %v68 = vunpack.c.l.b16 %v43
    %v69 = vunpack.c.l.b16 %v44
    %v70 = vunpack.c.l.b16 %v45
    %v71 = vunpack.c.l.b16 %v46
    %v72 = vunpack.c.l.b16 %v47
    %v73 = vunpack.c.l.b16 %v48
    %v74 = vunpack.c.l.b16 %v49
    %v75 = vunpack.c.l.b16 %v50
    %v76 = vpack.c.b16 %v69, %v68
    %v77 = vpack.c.b16 %v71, %v70
    %v78 = vpack.c.b16 %v73, %v72
    %v79 = vpack.c.b16 %v75, %v74
    %v84 = vunpack.c.l.b16 %v51
    %v85 = vunpack.c.l.b16 %v52
    %v86 = vunpack.c.l.b16 %v53
    %v87 = vunpack.c.l.b16 %v54
    %v88 = vpack.c.b16 %v85, %v84
    %v89 = vpack.c.b16 %v87, %v86
    %vm92 = vcmask 261120
    %v94 = vsel %vm92, %v76, 0
    %v97 = vsel %vm92, %v77, 0
    %v100 = vsel %vm92, %v78, 0
    %v103 = vsel %vm92, %v79, 0
    %105 = vmatprep.subr.bf16.mxu0 0
    %106 = vmatpush1.bf16.msra.mxu0 %v88
    %107 = vmatprep.subr.bf16.mxu0 0
    %108 = vmatpush1.bf16.msra.mxu0 %v89
    %109 = vmatprep.subr.bf16.mxu0 0
    %110 = vmatpush1.bf16.msra.mxu0 0
    %111 = vmatprep.subr.bf16.mxu0 0
    %112 = vmatpush1.bf16.msra.mxu0 0
    %113 = vmatprep.subr.bf16.mxu0 0
    %114 = vmatpush1.bf16.msra.mxu0 0
    %115 = vmatprep.subr.bf16.mxu0 0
    %116 = vmatpush1.bf16.msra.mxu0 0
    %117 = vmatprep.subr.bf16.mxu0 0
    %118 = vmatpush1.bf16.msra.mxu0 0
    %119 = vmatprep.subr.bf16.mxu0 0
    %120 = vmatpush1.bf16.msra.mxu0 0
    %121 = vmatprep.subr.bf16.mxu0 0
    %122 = vmatpush1.bf16.msra.mxu0 0
    %123 = vmatprep.subr.bf16.mxu0 0
    %124 = vmatpush1.bf16.msra.mxu0 0
    %125 = vmatprep.subr.bf16.mxu0 0
    %126 = vmatpush1.bf16.msra.mxu0 0
    %127 = vmatprep.subr.bf16.mxu0 0
    %128 = vmatpush1.bf16.msra.mxu0 0
    %129 = vmatprep.subr.bf16.mxu0 0
    %130 = vmatpush1.bf16.msra.mxu0 0
    %131 = vmatprep.subr.bf16.mxu0 0
    %132 = vmatpush1.bf16.msra.mxu0 0
    %133 = vmatprep.subr.bf16.mxu0 0
    %134 = vmatpush1.bf16.msra.mxu0 0
    %135 = vmatprep.subr.bf16.mxu0 0
    %136 = vmatpush1.bf16.msra.mxu0 0
    %137 = vmatprep.mubr.bf16.mxu0 0
    %138 = vmatmul.mubr.bf16.gmra.mrb[0].mxu0 %v94
    %v139 = vpop.f32.mrb[0].mxu0
    %v140 = vadd.f32 %v59, %v139
    %v141 = vpop.f32.mrb[0].mxu0
    %v142 = vpop.f32.mrb[0].mxu0
    %v143 = vadd.f32 %v59, %v142
    %v144 = vpop.f32.mrb[0].mxu0
    %145 = vmatprep.mubr.bf16.mxu0 0
    %146 = vmatmul.mubr.bf16.gmra.mrb[0].mxu0 %v97
    %v147 = vpop.f32.mrb[0].mxu0
    %v148 = vadd.f32 %v59, %v147
    %v149 = vpop.f32.mrb[0].mxu0
    %v150 = vpop.f32.mrb[0].mxu0
    %v151 = vadd.f32 %v59, %v150
    %v152 = vpop.f32.mrb[0].mxu0
    %153 = vmatprep.mubr.bf16.mxu0 0
    %154 = vmatmul.mubr.bf16.gmra.mrb[0].mxu0 %v100
    %v155 = vpop.f32.mrb[0].mxu0
    %v156 = vadd.f32 %v59, %v155
    %v157 = vpop.f32.mrb[0].mxu0
    %v158 = vpop.f32.mrb[0].mxu0
    %v159 = vadd.f32 %v59, %v158
    %v160 = vpop.f32.mrb[0].mxu0
    %161 = vmatprep.mubr.bf16.mxu0 0
    %162 = vmatmul.mubr.bf16.gmra.mrb[0].mxu0 %v103
    %v163 = vpop.f32.mrb[0].mxu0
    %v164 = vadd.f32 %v59, %v163
    %v165 = vpop.f32.mrb[0].mxu0
    %v166 = vpop.f32.mrb[0].mxu0
    %v167 = vadd.f32 %v59, %v166
    %v168 = vpop.f32.mrb[0].mxu0
    %169 = vdwg.mxu0
    %170 = vst.msk [vmem:[#allocation2] sm:$0xff] %vm92, %v140
    %171 = vst.msk [vmem:[#allocation2 + $0x8] sm:$0xff] %vm92, %v143
    %172 = vst.msk [vmem:[#allocation2 + $0x10] sm:$0xff] %vm92, %v148
    %173 = vst.msk [vmem:[#allocation2 + $0x18] sm:$0xff] %vm92, %v151
    %174 = vst.msk [vmem:[#allocation2 + $0x20] sm:$0xff] %vm92, %v156
    %175 = vst.msk [vmem:[#allocation2 + $0x28] sm:$0xff] %vm92, %v159
    %176 = vst.msk [vmem:[#allocation2 + $0x30] sm:$0xff] %vm92, %v164
    %177 = vst.msk [vmem:[#allocation2 + $0x38] sm:$0xff] %vm92, %v167
    %s178 = scalar_lea.vmem %s3, 16
    %v179 = vld [vmem:[%s178] sm:$0xf]
    %v180 = vld [vmem:[%s178 + $0x4] sm:$0xf]
    %v181 = vld [vmem:[%s178 + $0x8] sm:$0xf]
    %v182 = vld [vmem:[%s178 + $0xc] sm:$0xf]
    %v183 = vld [vmem:[%s5 + $0x1] sm:$0x1]
    %v184 = vlaneseq
    %v185 = vshrl.u32 %v184, 7
    %v186 = vsub.s32 0, %v185
    %v187 = vrot.slane %v183, %v186
    %v192 = vunpack.c.l.b16 %v179
    %v193 = vunpack.c.l.b16 %v180
    %v194 = vunpack.c.l.b16 %v181
    %v195 = vunpack.c.l.b16 %v182
    %v196 = vpack.c.b16 %v193, %v192
    %v197 = vpack.c.b16 %v195, %v194
    %200 = vmatprep.subr.bf16.mxu0 0
    %201 = vmatpush1.bf16.msra.mxu0 %v196
    %202 = vmatprep.subr.bf16.mxu0 0
    %203 = vmatpush1.bf16.msra.mxu0 %v197
    %204 = vmatprep.subr.bf16.mxu0 0
    %205 = vmatpush1.bf16.msra.mxu0 0
    %206 = vmatprep.subr.bf16.mxu0 0
    %207 = vmatpush1.bf16.msra.mxu0 0
    %208 = vmatprep.subr.bf16.mxu0 0
    %209 = vmatpush1.bf16.msra.mxu0 0
    %210 = vmatprep.subr.bf16.mxu0 0
    %211 = vmatpush1.bf16.msra.mxu0 0
    %212 = vmatprep.subr.bf16.mxu0 0
    %213 = vmatpush1.bf16.msra.mxu0 0
    %214 = vmatprep.subr.bf16.mxu0 0
    %215 = vmatpush1.bf16.msra.mxu0 0
    %216 = vmatprep.subr.bf16.mxu0 0
    %217 = vmatpush1.bf16.msra.mxu0 0
    %218 = vmatprep.subr.bf16.mxu0 0
    %219 = vmatpush1.bf16.msra.mxu0 0
    %220 = vmatprep.subr.bf16.mxu0 0
    %221 = vmatpush1.bf16.msra.mxu0 0
    %222 = vmatprep.subr.bf16.mxu0 0
    %223 = vmatpush1.bf16.msra.mxu0 0
    %224 = vmatprep.subr.bf16.mxu0 0
    %225 = vmatpush1.bf16.msra.mxu0 0
    %226 = vmatprep.subr.bf16.mxu0 0
    %227 = vmatpush1.bf16.msra.mxu0 0
    %228 = vmatprep.subr.bf16.mxu0 0
    %229 = vmatpush1.bf16.msra.mxu0 0
    %230 = vmatprep.subr.bf16.mxu0 0
    %231 = vmatpush1.bf16.msra.mxu0 0
    %232 = vmatprep.mubr.bf16.mxu0 0
    %233 = vmatmul.mubr.bf16.gmra.mrb[0].mxu0 %v94
    %v234 = vpop.f32.mrb[0].mxu0
    %v235 = vadd.f32 %v187, %v234
    %v236 = vpop.f32.mrb[0].mxu0
    %v237 = vpop.f32.mrb[0].mxu0
    %v238 = vadd.f32 %v187, %v237
    %v239 = vpop.f32.mrb[0].mxu0
    %240 = vmatprep.mubr.bf16.mxu0 0
    %241 = vmatmul.mubr.bf16.gmra.mrb[0].mxu0 %v97
    %v242 = vpop.f32.mrb[0].mxu0
    %v243 = vadd.f32 %v187, %v242
    %v244 = vpop.f32.mrb[0].mxu0
    %v245 = vpop.f32.mrb[0].mxu0
    %v246 = vadd.f32 %v187, %v245
    %v247 = vpop.f32.mrb[0].mxu0
    %248 = vmatprep.mubr.bf16.mxu0 0
    %249 = vmatmul.mubr.bf16.gmra.mrb[0].mxu0 %v100
    %v250 = vpop.f32.mrb[0].mxu0
    %v251 = vadd.f32 %v187, %v250
    %v252 = vpop.f32.mrb[0].mxu0
    %v253 = vpop.f32.mrb[0].mxu0
    %v254 = vadd.f32 %v187, %v253
    %v255 = vpop.f32.mrb[0].mxu0
    %256 = vmatprep.mubr.bf16.mxu0 0
    %257 = vmatmul.mubr.bf16.gmra.mrb[0].mxu0 %v103
    %v258 = vpop.f32.mrb[0].mxu0
    %v259 = vadd.f32 %v187, %v258
    %v260 = vpop.f32.mrb[0].mxu0
    %v261 = vpop.f32.mrb[0].mxu0
    %v262 = vadd.f32 %v187, %v261
    %v263 = vpop.f32.mrb[0].mxu0
    %264 = vdwg.mxu0
    %265 = vst.msk [vmem:[#allocation3] sm:$0xff] %vm92, %v235
    %266 = vst.msk [vmem:[#allocation3 + $0x8] sm:$0xff] %vm92, %v238
    %267 = vst.msk [vmem:[#allocation3 + $0x10] sm:$0xff] %vm92, %v243
    %268 = vst.msk [vmem:[#allocation3 + $0x18] sm:$0xff] %vm92, %v246
    %269 = vst.msk [vmem:[#allocation3 + $0x20] sm:$0xff] %vm92, %v251
    %270 = vst.msk [vmem:[#allocation3 + $0x28] sm:$0xff] %vm92, %v254
    %271 = vst.msk [vmem:[#allocation3 + $0x30] sm:$0xff] %vm92, %v259
    %272 = vst.msk [vmem:[#allocation3 + $0x38] sm:$0xff] %vm92, %v262
    %s273 = scalar_lea.vmem %s3, 32
    %v274 = vld [vmem:[%s273] sm:$0xf]
    %v275 = vld [vmem:[%s273 + $0x4] sm:$0xf]
    %v276 = vld [vmem:[%s273 + $0x8] sm:$0xf]
    %v277 = vld [vmem:[%s273 + $0xc] sm:$0xf]
    %v278 = vld [vmem:[%s5 + $0x2] sm:$0x1]
    %v279 = vlaneseq
    %v280 = vshrl.u32 %v279, 7
    %v281 = vsub.s32 0, %v280
    %v282 = vrot.slane %v278, %v281
    %v287 = vunpack.c.l.b16 %v274
    %v288 = vunpack.c.l.b16 %v275
    %v289 = vunpack.c.l.b16 %v276
    %v290 = vunpack.c.l.b16 %v277
    %v291 = vpack.c.b16 %v288, %v287
    %v292 = vpack.c.b16 %v290, %v289
    %295 = vmatprep.subr.bf16.mxu0 0
    %296 = vmatpush1.bf16.msra.mxu0 %v291
    %297 = vmatprep.subr.bf16.mxu0 0
    %298 = vmatpush1.bf16.msra.mxu0 %v292
    %299 = vmatprep.subr.bf16.mxu0 0
    %300 = vmatpush1.bf16.msra.mxu0 0
    %301 = vmatprep.subr.bf16.mxu0 0
    %302 = vmatpush1.bf16.msra.mxu0 0
    %303 = vmatprep.subr.bf16.mxu0 0
    %304 = vmatpush1.bf16.msra.mxu0 0
    %305 = vmatprep.subr.bf16.mxu0 0
    %306 = vmatpush1.bf16.msra.mxu0 0
    %307 = vmatprep.subr.bf16.mxu0 0
    %308 = vmatpush1.bf16.msra.mxu0 0
    %309 = vmatprep.subr.bf16.mxu0 0
    %310 = vmatpush1.bf16.msra.mxu0 0
    %311 = vmatprep.subr.bf16.mxu0 0
    %312 = vmatpush1.bf16.msra.mxu0 0
    %313 = vmatprep.subr.bf16.mxu0 0
    %314 = vmatpush1.bf16.msra.mxu0 0
    %315 = vmatprep.subr.bf16.mxu0 0
    %316 = vmatpush1.bf16.msra.mxu0 0
    %317 = vmatprep.subr.bf16.mxu0 0
    %318 = vmatpush1.bf16.msra.mxu0 0
    %319 = vmatprep.subr.bf16.mxu0 0
    %320 = vmatpush1.bf16.msra.mxu0 0
    %321 = vmatprep.subr.bf16.mxu0 0
    %322 = vmatpush1.bf16.msra.mxu0 0
    %323 = vmatprep.subr.bf16.mxu0 0
    %324 = vmatpush1.bf16.msra.mxu0 0
    %325 = vmatprep.subr.bf16.mxu0 0
    %326 = vmatpush1.bf16.msra.mxu0 0
    %327 = vmatprep.mubr.bf16.mxu0 0
    %328 = vmatmul.mubr.bf16.gmra.mrb[0].mxu0 %v94
    %v329 = vpop.f32.mrb[0].mxu0
    %v330 = vadd.f32 %v282, %v329
    %v331 = vpop.f32.mrb[0].mxu0
    %v332 = vpop.f32.mrb[0].mxu0
    %v333 = vadd.f32 %v282, %v332
    %v334 = vpop.f32.mrb[0].mxu0
    %335 = vmatprep.mubr.bf16.mxu0 0
    %336 = vmatmul.mubr.bf16.gmra.mrb[0].mxu0 %v97
    %v337 = vpop.f32.mrb[0].mxu0
    %v338 = vadd.f32 %v282, %v337
    %v339 = vpop.f32.mrb[0].mxu0
    %v340 = vpop.f32.mrb[0].mxu0
    %v341 = vadd.f32 %v282, %v340
    %v342 = vpop.f32.mrb[0].mxu0
    %343 = vmatprep.mubr.bf16.mxu0 0
    %344 = vmatmul.mubr.bf16.gmra.mrb[0].mxu0 %v100
    %v345 = vpop.f32.mrb[0].mxu0
    %v346 = vadd.f32 %v282, %v345
    %v347 = vpop.f32.mrb[0].mxu0
    %v348 = vpop.f32.mrb[0].mxu0
    %v349 = vadd.f32 %v282, %v348
    %v350 = vpop.f32.mrb[0].mxu0
    %351 = vmatprep.mubr.bf16.mxu0 0
    %352 = vmatmul.mubr.bf16.gmra.mrb[0].mxu0 %v103
    %v353 = vpop.f32.mrb[0].mxu0
    %v354 = vadd.f32 %v282, %v353
    %v355 = vpop.f32.mrb[0].mxu0
    %v356 = vpop.f32.mrb[0].mxu0
    %v357 = vadd.f32 %v282, %v356
    %v358 = vpop.f32.mrb[0].mxu0
    %359 = vdwg.mxu0
    %360 = vst.msk [vmem:[#allocation4] sm:$0xff] %vm92, %v330
    %361 = vst.msk [vmem:[#allocation4 + $0x8] sm:$0xff] %vm92, %v333
    %362 = vst.msk [vmem:[#allocation4 + $0x10] sm:$0xff] %vm92, %v338
    %363 = vst.msk [vmem:[#allocation4 + $0x18] sm:$0xff] %vm92, %v341
    %364 = vst.msk [vmem:[#allocation4 + $0x20] sm:$0xff] %vm92, %v346
    %365 = vst.msk [vmem:[#allocation4 + $0x28] sm:$0xff] %vm92, %v349
    %366 = vst.msk [vmem:[#allocation4 + $0x30] sm:$0xff] %vm92, %v354
    %367 = vst.msk [vmem:[#allocation4 + $0x38] sm:$0xff] %vm92, %v357
    %v368 = vld [vmem:[%s6] sm:$0x1]
    %v369 = vld [vmem:[%s6 + $0x1] sm:$0x1]
    %v370 = vld [vmem:[%s6 + $0x2] sm:$0x1]
    %v371 = vld [vmem:[%s2] sm:$0xff]
    %s372 = sld [smem:[#allocation5]]
    // While loop
    $region34: #{tpu_custom_call.1} parent=1 // loop_pre_header
      _
    $region35: #{tpu_custom_call.1} parent=1 // loop_header
      %s374 = sphi 0, %s376
      %p375 = scmp.ge.s32.totalorder %s374, %s372
      %v379 = vphi 0.0, %v601
    $region36: #{tpu_custom_call.1} parent=1 // loop_header_branch
      %378 = sbr.rel (%p375) target = $region40
    $region37: #{tpu_custom_call.1} parent=1 // loop_body
      %s380 = smul.u32 %s374, 8
      %v381 = vpack.c.bf16 %v379, %v379
      %v382 = vld [vmem:[#allocation6] sm:$0xf]
      %v383 = vld [vmem:[#allocation6 + $0x4] sm:$0xf]
      %v384 = vld [vmem:[#allocation6 + $0x8] sm:$0xf]
      %v385 = vld [vmem:[#allocation6 + $0xc] sm:$0xf]
      %v386 = vlaneseq
      %v387 = vshrl.u32 %v386, 7
      %v388 = vsub.s32 0, %v387
      %v389 = vrot.slane %v368, %v388
      %v394 = vunpack.c.l.b16 %v382
      %v395 = vunpack.c.l.b16 %v383
      %v396 = vunpack.c.l.b16 %v384
      %v397 = vunpack.c.l.b16 %v385
      %v398 = vpack.c.b16 %v395, %v394
      %v399 = vpack.c.b16 %v397, %v396
      %v403 = vsel %vm92, %v381, 0
      %405 = vmatprep.subr.bf16.mxu0 0
      %406 = vmatpush1.bf16.msra.mxu0 %v398
      %407 = vmatprep.subr.bf16.mxu0 0
      %408 = vmatpush1.bf16.msra.mxu0 %v399
      %409 = vmatprep.subr.bf16.mxu0 0
      %410 = vmatpush1.bf16.msra.mxu0 0
      %411 = vmatprep.subr.bf16.mxu0 0
      %412 = vmatpush1.bf16.msra.mxu0 0
      %413 = vmatprep.subr.bf16.mxu0 0
      %414 = vmatpush1.bf16.msra.mxu0 0
      %415 = vmatprep.subr.bf16.mxu0 0
      %416 = vmatpush1.bf16.msra.mxu0 0
      %417 = vmatprep.subr.bf16.mxu0 0
      %418 = vmatpush1.bf16.msra.mxu0 0
      %419 = vmatprep.subr.bf16.mxu0 0
      %420 = vmatpush1.bf16.msra.mxu0 0
      %421 = vmatprep.subr.bf16.mxu0 0
      %422 = vmatpush1.bf16.msra.mxu0 0
      %423 = vmatprep.subr.bf16.mxu0 0
      %424 = vmatpush1.bf16.msra.mxu0 0
      %425 = vmatprep.subr.bf16.mxu0 0
      %426 = vmatpush1.bf16.msra.mxu0 0
      %427 = vmatprep.subr.bf16.mxu0 0
      %428 = vmatpush1.bf16.msra.mxu0 0
      %429 = vmatprep.subr.bf16.mxu0 0
      %430 = vmatpush1.bf16.msra.mxu0 0
      %431 = vmatprep.subr.bf16.mxu0 0
      %432 = vmatpush1.bf16.msra.mxu0 0
      %433 = vmatprep.subr.bf16.mxu0 0
      %434 = vmatpush1.bf16.msra.mxu0 0
      %435 = vmatprep.subr.bf16.mxu0 0
      %436 = vmatpush1.bf16.msra.mxu0 0
      %437 = vmatprep.mubr.bf16.mxu0 0
      %438 = vmatmul.mubr.bf16.gmra.mrb[0].mxu0 %v403
      %v439 = vpop.f32.mrb[0].mxu0
      %v440 = vadd.f32 %v389, %v439
      %v441 = vpop.f32.mrb[0].mxu0
      %v442 = vpop.f32.mrb[0].mxu0
      %v443 = vpop.f32.mrb[0].mxu0
      %444 = vdwg.mxu0
      %s445 = scalar_lea.vmem [#allocation6], 16
      %v446 = vld [vmem:[%s445] sm:$0xf]
      %v447 = vld [vmem:[%s445 + $0x4] sm:$0xf]
      %v448 = vld [vmem:[%s445 + $0x8] sm:$0xf]
      %v449 = vld [vmem:[%s445 + $0xc] sm:$0xf]
      %v450 = vlaneseq
      %v451 = vshrl.u32 %v450, 7
      %v452 = vsub.s32 0, %v451
      %v453 = vrot.slane %v369, %v452
      %v458 = vunpack.c.l.b16 %v446
      %v459 = vunpack.c.l.b16 %v447
      %v460 = vunpack.c.l.b16 %v448
      %v461 = vunpack.c.l.b16 %v449
      %v462 = vpack.c.b16 %v459, %v458
      %v463 = vpack.c.b16 %v461, %v460
      %466 = vmatprep.subr.bf16.mxu0 0
      %467 = vmatpush1.bf16.msra.mxu0 %v462
      %468 = vmatprep.subr.bf16.mxu0 0
      %469 = vmatpush1.bf16.msra.mxu0 %v463
      %470 = vmatprep.subr.bf16.mxu0 0
      %471 = vmatpush1.bf16.msra.mxu0 0
      %472 = vmatprep.subr.bf16.mxu0 0
      %473 = vmatpush1.bf16.msra.mxu0 0
      %474 = vmatprep.subr.bf16.mxu0 0
      %475 = vmatpush1.bf16.msra.mxu0 0
      %476 = vmatprep.subr.bf16.mxu0 0
      %477 = vmatpush1.bf16.msra.mxu0 0
      %478 = vmatprep.subr.bf16.mxu0 0
      %479 = vmatpush1.bf16.msra.mxu0 0
      %480 = vmatprep.subr.bf16.mxu0 0
      %481 = vmatpush1.bf16.msra.mxu0 0
      %482 = vmatprep.subr.bf16.mxu0 0
      %483 = vmatpush1.bf16.msra.mxu0 0
      %484 = vmatprep.subr.bf16.mxu0 0
      %485 = vmatpush1.bf16.msra.mxu0 0
      %486 = vmatprep.subr.bf16.mxu0 0
      %487 = vmatpush1.bf16.msra.mxu0 0
      %488 = vmatprep.subr.bf16.mxu0 0
      %489 = vmatpush1.bf16.msra.mxu0 0
      %490 = vmatprep.subr.bf16.mxu0 0
      %491 = vmatpush1.bf16.msra.mxu0 0
      %492 = vmatprep.subr.bf16.mxu0 0
      %493 = vmatpush1.bf16.msra.mxu0 0
      %494 = vmatprep.subr.bf16.mxu0 0
      %495 = vmatpush1.bf16.msra.mxu0 0
      %496 = vmatprep.subr.bf16.mxu0 0
      %497 = vmatpush1.bf16.msra.mxu0 0
      %498 = vmatprep.mubr.bf16.mxu0 0
      %499 = vmatmul.mubr.bf16.gmra.mrb[0].mxu0 %v403
      %v500 = vpop.f32.mrb[0].mxu0
      %v501 = vadd.f32 %v453, %v500
      %v502 = vpop.f32.mrb[0].mxu0
      %v503 = vpop.f32.mrb[0].mxu0
      %v504 = vpop.f32.mrb[0].mxu0
      %505 = vdwg.mxu0
      %s506 = scalar_lea.vmem [#allocation6], 32
      %v507 = vld [vmem:[%s506] sm:$0xf]
      %v508 = vld [vmem:[%s506 + $0x4] sm:$0xf]
      %v509 = vld [vmem:[%s506 + $0x8] sm:$0xf]
      %v510 = vld [vmem:[%s506 + $0xc] sm:$0xf]
      %v511 = vlaneseq
      %v512 = vshrl.u32 %v511, 7
      %v513 = vsub.s32 0, %v512
      %v514 = vrot.slane %v370, %v513
      %v519 = vunpack.c.l.b16 %v507
      %v520 = vunpack.c.l.b16 %v508
      %v521 = vunpack.c.l.b16 %v509
      %v522 = vunpack.c.l.b16 %v510
      %v523 = vpack.c.b16 %v520, %v519
      %v524 = vpack.c.b16 %v522, %v521
      %527 = vmatprep.subr.bf16.mxu0 0
      %528 = vmatpush1.bf16.msra.mxu0 %v523
      %529 = vmatprep.subr.bf16.mxu0 0
      %530 = vmatpush1.bf16.msra.mxu0 %v524
      %531 = vmatprep.subr.bf16.mxu0 0
      %532 = vmatpush1.bf16.msra.mxu0 0
      %533 = vmatprep.subr.bf16.mxu0 0
      %534 = vmatpush1.bf16.msra.mxu0 0
      %535 = vmatprep.subr.bf16.mxu0 0
      %536 = vmatpush1.bf16.msra.mxu0 0
      %537 = vmatprep.subr.bf16.mxu0 0
      %538 = vmatpush1.bf16.msra.mxu0 0
      %539 = vmatprep.subr.bf16.mxu0 0
      %540 = vmatpush1.bf16.msra.mxu0 0
      %541 = vmatprep.subr.bf16.mxu0 0
      %542 = vmatpush1.bf16.msra.mxu0 0
      %543 = vmatprep.subr.bf16.mxu0 0
      %544 = vmatpush1.bf16.msra.mxu0 0
      %545 = vmatprep.subr.bf16.mxu0 0
      %546 = vmatpush1.bf16.msra.mxu0 0
      %547 = vmatprep.subr.bf16.mxu0 0
      %548 = vmatpush1.bf16.msra.mxu0 0
      %549 = vmatprep.subr.bf16.mxu0 0
      %550 = vmatpush1.bf16.msra.mxu0 0
      %551 = vmatprep.subr.bf16.mxu0 0
      %552 = vmatpush1.bf16.msra.mxu0 0
      %553 = vmatprep.subr.bf16.mxu0 0
      %554 = vmatpush1.bf16.msra.mxu0 0
      %555 = vmatprep.subr.bf16.mxu0 0
      %556 = vmatpush1.bf16.msra.mxu0 0
      %557 = vmatprep.subr.bf16.mxu0 0
      %558 = vmatpush1.bf16.msra.mxu0 0
      %559 = vmatprep.mubr.bf16.mxu0 0
      %560 = vmatmul.mubr.bf16.gmra.mrb[0].mxu0 %v403
      %v561 = vpop.f32.mrb[0].mxu0
      %v562 = vadd.f32 %v514, %v561
      %v563 = vpop.f32.mrb[0].mxu0
      %v564 = vpop.f32.mrb[0].mxu0
      %v565 = vpop.f32.mrb[0].mxu0
      %566 = vdwg.mxu0
      %s567 = scalar_lea.vmem [#allocation2], %s380
      %v568 = vld [vmem:[%s567] sm:$0xff]
      %v569 = vadd.f32 %v568, %v440
      %v570 = vxor.u32 %v569, 2147483648
      %v571 = vmul.f32 %v570, 1.442695
      %v572 = vpow.pop %v571
      %v573 = vadd.f32 %v572, 1.0
      %v574 = vrcp.pop %v573
      %v575 = vmul.f32 1.0, %v574
      %s576 = scalar_lea.vmem [#allocation3], %s380
      %v577 = vld [vmem:[%s576] sm:$0xff]
      %v578 = vadd.f32 %v577, %v501
      %v579 = vxor.u32 %v578, 2147483648
      %v580 = vmul.f32 %v579, 1.442695
      %v581 = vpow.pop %v580
      %v582 = vadd.f32 %v581, 1.0
      %v583 = vrcp.pop %v582
      %v584 = vmul.f32 1.0, %v583
      %s585 = scalar_lea.vmem [#allocation4], %s380
      %v586 = vld [vmem:[%s585] sm:$0xff]
      %v587 = vmul.f32 %v575, %v562
      %v588 = vadd.f32 %v586, %v587
      %v589 = vtanh.pop %v588
      %v590 = vsub.f32 1.0, %v584
      %v591 = vmul.f32 %v590, %v589
      %v592 = vmul.f32 %v584, %v379
      %v593 = vadd.f32 %v591, %v592
      %v594 = vstv %s374
      %vm595 = vcmp.lt.s32.totalorder %v594, %v371
      %v596 = vsel %vm595, 1, 0
      %597 = vset.pattern.permute.xlu0 0
      %598 = vperm.xlu0 %597, %v596
      %v599 = vpop.permute.xlu0 %598
      %vm600 = vcmp.eq.s32.totalorder %v599, 1
      %v601 = vsel %vm600, %v593, %v379
    $region38: #{tpu_custom_call.1} parent=1 // loop_footer
      %s376 = sadd.s32 %s374, 1
    $region39: #{tpu_custom_call.1} parent=1 // loop_footer_branch
      %373 = sbr.rel target = $region35
    $region40: #{tpu_custom_call.1} parent=1 // loop_exit
      _
    %602 = vst.msk [vmem:[#allocation9] sm:$0xff] %vm92, %v379
    // Predicated region
    $region41: #{tpu_custom_call.1} parent=1 // pred_check
      _
    $region42: #{tpu_custom_call.1} parent=1 // pred_check_branch
      %604 = sbr.rel (0) target = $region44
    $region43: #{tpu_custom_call.1} parent=1 // pred_region
      %s606 = ssub.s32 128, 128
      %607 = vsyncadd [#allocation8], %s606
      %s609 = sshll.u32 [#allocation9], 4
      %s610 = int_to_ptr.vmem [resolvable:$true] %s609
      %612 = dma.vmem_to_hbm [thread:$0]  %s610, 128, %s7, [#allocation8]
    $region44: #{tpu_custom_call.1} parent=1 // pred_fallthru
      _
    // Predicated region
    $region45: #{tpu_custom_call.1} parent=1 // pred_check
      _
    $region46: #{tpu_custom_call.1} parent=1 // pred_check_branch
      %614 = sbr.rel (0) target = $region48
    $region47: #{tpu_custom_call.1} parent=1 // pred_region
      %615 = dma.done [#allocation8], 128
    $region48: #{tpu_custom_call.1} parent=1 // pred_fallthru
      _
    %616 = vsyncpa [#allocation7], 1
    %617 = vsyncpa [#allocation8], 1

</llo_original>
